<compile_context>
chip_gen: v5e
topology: v5e:2x2
jax: 0.10.0
libtpu: 0.0.40
codegen_flags: <defaults>
</compile_context>

<pallas_src>
import functools

import jax
import jax.numpy as jnp
from jax import lax
from jax.experimental import pallas as pl
from jax.experimental.pallas import tpu as pltpu


def _patch_embed_kernel(x_ref, w_ref, b_ref, o_ref, xt_ref, *,
                        ph, pw, Wp, TH, compute_dtype):
    """One grid step: TH patch-rows of one image.

    x_ref : (C, TH, ph*W)   native-layout input rows for these patch-rows
    w_ref : (ph*pw, C, E)   resident per-tap projection weights
    b_ref : (1, E) f32      resident bias
    o_ref : (TH*Wp, E)      output rows for this tile
    xt_ref: (ph*W, C) f32   scratch: transposed patch-row (positions x channels)
    """
    W_eff = Wp * pw
    E = o_ref.shape[-1]

    def row_body(t, carry):
        # Move patch positions (lane dim of x) onto sublanes with one 2-D XLU
        # transpose so that per-tap gathers become sublane-strided loads.
        x_row = x_ref[:, t, :].astype(jnp.float32)          # (C, ph*W)
        xt_ref[...] = jnp.transpose(x_row, (1, 0))          # (ph*W, C)

        acc = jnp.zeros((Wp, E), jnp.float32)
        for kh in range(ph):
            for kw in range(pw):
                q = kh * pw + kw
                # rows kh*W + kw + pw*{0..Wp-1}  ->  (Wp, C) patch slab for tap q
                slab = xt_ref[pl.ds(kh * W_eff + kw, Wp, stride=pw), :]
                acc = acc + jnp.dot(slab.astype(compute_dtype), w_ref[q],
                                    preferred_element_type=jnp.float32)
        out_row = acc + b_ref[...]                           # bias add in f32
        o_ref[pl.ds(t * Wp, Wp), :] = out_row.astype(o_ref.dtype)
        return carry

    lax.fori_loop(0, TH, row_body, 0)


def patch_embed(x, weight, bias, patch_size, compute_dtype=None):
    """x: (B, C, H, W)  weight: (E, C, ph, pw)  bias: (E,)  ->  (B, Hp*Wp, E)."""
    B, C, H, W = x.shape
    ph, pw = patch_size
    Hp, Wp = H // ph, W // pw
    E = weight.shape[0]
    H_eff, W_eff = Hp * ph, Wp * pw
    cdt = jnp.dtype(compute_dtype) if compute_dtype is not None else jnp.dtype(jnp.float32)

    # Crop any remainder rows/cols (stride==kernel_size conv drops them).
    if (H != H_eff) or (W != W_eff):
        x = x[:, :, :H_eff, :W_eff]
    # Free, row-major-preserving reshape: (B, C, Hp*ph, W) -> (B, C, Hp, ph*W).
    x4 = x.reshape(B, C, Hp, ph * W_eff)

    # Per-tap projection weights, tap-major: w_taps[kh*pw+kw, c, e] = weight[e, c, kh, kw].
    w_taps = jnp.transpose(weight, (2, 3, 1, 0)).reshape(ph * pw, C, E).astype(cdt)
    b2 = bias.reshape(1, E).astype(jnp.float32)

    # --- TH = patch-rows per grid step ---------------------------------------
    in_isz = jnp.dtype(x.dtype).itemsize
    out_isz = in_isz
    cdt_isz = jnp.dtype(cdt).itemsize
    sub = {4: 8, 2: 16, 1: 32}.get(in_isz, 8)        # sublane packing of x's dtype
    IN_BLOCK_BUDGET = 4 * 1024 * 1024                # per-buffer input block (fits all gens)
    if Hp % sub == 0 and Hp > sub:
        TH = sub
        # Grow TH while it divides Hp, stays under the block budget, and the grid
        # keeps >= 2 steps (so v7x's second TensorCore has work and DMA overlaps).
        while (Hp % (TH * 2) == 0
               and C * (TH * 2) * ph * W_eff * in_isz <= IN_BLOCK_BUDGET
               and B * (Hp // (TH * 2)) >= 2):
            TH *= 2
    else:
        TH = Hp                                      # full dim -> exempt from (8,128) rule
    grid = (B, Hp // TH)
    M = Hp * Wp

    # --- VMEM accounting (incl. f32 scratch / accumulator temps), cap < 64 MiB.
    est = (2 * C * TH * ph * W_eff * in_isz          # input blocks (double-buffered)
           + 2 * TH * Wp * E * out_isz               # output blocks (double-buffered)
           + 2 * ph * pw * C * E * cdt_isz           # resident per-tap weights
           + 2 * max(E, 128) * 4                     # resident bias
           + (ph * W_eff) * max(C, 128) * 4          # f32 transpose scratch (lane-padded)
           + 4 * Wp * max(E, 128) * 4)               # f32 accumulator / row temporaries
    vmem_limit = int(min(max(2 * est, 16 << 20), 56 << 20))

    cost = pl.CostEstimate(
        flops=2 * B * M * E * C * ph * pw,
        transcendentals=0,
        bytes_accessed=(B * C * H_eff * W_eff * in_isz
                        + ph * pw * C * E * cdt_isz
                        + B * M * E * out_isz),
    )

    kernel = functools.partial(_patch_embed_kernel, ph=ph, pw=pw, Wp=Wp, TH=TH,
                               compute_dtype=cdt)
    out = pl.pallas_call(
        kernel,
        out_shape=jax.ShapeDtypeStruct((B, M, E), x.dtype),
        grid=grid,
        in_specs=[
            pl.BlockSpec((None, C, TH, ph * W_eff), lambda b, i: (b, 0, i, 0)),  # streamed x rows
            pl.BlockSpec((ph * pw, C, E), lambda b, i: (0, 0, 0)),               # resident weights
            pl.BlockSpec((1, E), lambda b, i: (0, 0)),                           # resident bias
        ],
        out_specs=pl.BlockSpec((None, TH * Wp, E), lambda b, i: (b, i, 0)),
        scratch_shapes=[pltpu.VMEM((ph * W_eff, C), jnp.float32)],
        compiler_params=pltpu.CompilerParams(
            dimension_semantics=("parallel", "parallel"),
            vmem_limit_bytes=vmem_limit,
        ),
        cost_estimate=cost,
    )(x4, w_taps, b2)

    # Already in the module's (B, num_patches, embed_dim) layout; norm=Identity.
    return out


if __name__ == "__main__":
    # Module-consistent small shapes: img_size=16, patch_size=4, in_chans=4, embed_dim=32.
    B, C, H, W = 2, 4, 16, 16
    ph = pw = 4
    E = 32

    key = jax.random.PRNGKey(0)
    kx, kw_, kb = jax.random.split(key, 3)
    x = jax.random.normal(kx, (B, C, H, W), dtype=jnp.float32)
    weight = jax.random.normal(kw_, (E, C, ph, pw), dtype=jnp.float32) * 0.05
    bias = jax.random.normal(kb, (E,), dtype=jnp.float32) * 0.05

    # Reference: the stride==kernel Conv2d + flatten(2).transpose(1, 2).
    ref_conv = lax.conv_general_dilated(
        x, weight, window_strides=(ph, pw), padding="VALID",
        dimension_numbers=("NCHW", "OIHW", "NCHW"),
    ) + bias.reshape(1, E, 1, 1)
    ref = ref_conv.reshape(B, E, -1).transpose(0, 2, 1)

    # f32 path (exact-precision check).
    run_f32 = jax.jit(lambda a, w, b: patch_embed(a, w, b, (ph, pw)))
    out_f32 = jax.block_until_ready(run_f32(x, weight, bias))
    assert out_f32.shape == (B, (H // ph) * (W // pw), E)
    assert jnp.allclose(out_f32, ref, atol=1e-4, rtol=1e-4)

    # bf16 MXU-operand path (f32 accumulation on the MXU).
    run_bf16 = jax.jit(lambda a, w, b: patch_embed(a, w, b, (ph, pw),
                                                   compute_dtype=jnp.bfloat16))
    out_bf16 = jax.block_until_ready(run_bf16(x, weight, bias))
    assert out_bf16.shape == (B, (H // ph) * (W // pw), E)
    assert jnp.allclose(out_bf16, ref, atol=5e-2, rtol=5e-2)

    print("KERNEL_OK")
</pallas_src>

<mosaic_0001>
module attributes {stable_mosaic.version = 11 : i64} {
  func.func @_patch_embed_kernel(%arg0: i32, %arg1: i32, %arg2: memref<1x4x4x64xf32, #tpu.memory_space<vmem>>, %arg3: memref<16x4x32xf32, #tpu.memory_space<vmem>>, %arg4: memref<1x32xf32, #tpu.memory_space<vmem>>, %arg5: memref<1x16x32xf32, #tpu.memory_space<vmem>>, %arg6: memref<64x4xf32, #tpu.memory_space<vmem>>) attributes {dimension_semantics = [#tpu.dimension_semantics<parallel>, #tpu.dimension_semantics<parallel>], iteration_bounds = array<i64: 2, 1>, scalar_prefetch = 0 : i64, scratch_operands = 1 : i64, tpu.core_type = #tpu.core_type<tc>, window_params = [{transform_indices = @transform_0, window_bounds = array<i64: 1, 4, 4, 64>}, {pipeline_mode = #tpu.pipeline_mode<synchronous>, transform_indices = @transform_1, window_bounds = array<i64: 16, 4, 32>}, {pipeline_mode = #tpu.pipeline_mode<synchronous>, transform_indices = @transform_2, window_bounds = array<i64: 1, 32>}, {transform_indices = @transform_3, window_bounds = array<i64: 1, 16, 32>}]} {
    %c0_i32 = arith.constant 0 : i32
    %c4_i32 = arith.constant 4 : i32
    %0 = arith.addi %c0_i32, %c4_i32 : i32
    %c1_i32 = arith.constant 1 : i32
    scf.for %arg7 = %c0_i32 to %0 step %c1_i32  : i32 {
      %c0 = arith.constant 0 : index
      %c0_1 = arith.constant 0 : index
      %1 = arith.index_cast %arg7 : i32 to index
      %c0_2 = arith.constant 0 : index
      %2 = vector.load %arg2[%c0, %c0_1, %1, %c0_2] : memref<1x4x4x64xf32, #tpu.memory_space<vmem>>, vector<1x4x1x64xf32>
      %3 = vector.shape_cast %2 : vector<1x4x1x64xf32> to vector<4x64xf32>
      %4 = tpu.transpose %3, [1, 0] : vector<4x64xf32> -> vector<64x4xf32>
      %c0_3 = arith.constant 0 : index
      %c0_4 = arith.constant 0 : index
      %5 = vector.load %arg6[%c0_3, %c0_4] : memref<64x4xf32, #tpu.memory_space<vmem>>, vector<64x4xf32>
      tpu.vector_store %arg6[%c0_3, %c0_4], %4 {strides = array<i32>} : memref<64x4xf32, #tpu.memory_space<vmem>>, vector<64x4xf32>,
      %cst = arith.constant 0.000000e+00 : f32
      %6 = vector.broadcast %cst : f32 to vector<4x32xf32>
      %c0_5 = arith.constant 0 : index
      %c0_6 = arith.constant 0 : index
      %7 = tpu.strided_load %arg6[%c0_5, %c0_6] {strides = array<i32: 4, 1>} : memref<64x4xf32, #tpu.memory_space<vmem>>, vector<4x4xf32>
      %c0_7 = arith.constant 0 : index
      %c0_8 = arith.constant 0 : index
      %c0_9 = arith.constant 0 : index
      %8 = vector.load %arg3[%c0_7, %c0_8, %c0_9] : memref<16x4x32xf32, #tpu.memory_space<vmem>>, vector<1x4x32xf32>
      %9 = vector.shape_cast %8 : vector<1x4x32xf32> to vector<4x32xf32>
      %cst_10 = arith.constant dense<0.000000e+00> : vector<4x32xf32>
      %10 = tpu.matmul %7, %9, %cst_10 {dimension_numbers = #tpu.dot_dimension_numbers<[1], [0], [0], [1], [0, 0, 1, 1], [], []>} : vector<4x4xf32>, vector<4x32xf32>, vector<4x32xf32> -> vector<4x32xf32>
      %11 = arith.addf %6, %10 : vector<4x32xf32>
      %c1 = arith.constant 1 : index
      %c0_11 = arith.constant 0 : index
      %12 = tpu.strided_load %arg6[%c1, %c0_11] {strides = array<i32: 4, 1>} : memref<64x4xf32, #tpu.memory_space<vmem>>, vector<4x4xf32>
      %c1_12 = arith.constant 1 : index
      %c0_13 = arith.constant 0 : index
      %c0_14 = arith.constant 0 : index
      %13 = vector.load %arg3[%c1_12, %c0_13, %c0_14] : memref<16x4x32xf32, #tpu.memory_space<vmem>>, vector<1x4x32xf32>
      %14 = vector.shape_cast %13 : vector<1x4x32xf32> to vector<4x32xf32>
      %cst_15 = arith.constant dense<0.000000e+00> : vector<4x32xf32>
      %15 = tpu.matmul %12, %14, %cst_15 {dimension_numbers = #tpu.dot_dimension_numbers<[1], [0], [0], [1], [0, 0, 1, 1], [], []>} : vector<4x4xf32>, vector<4x32xf32>, vector<4x32xf32> -> vector<4x32xf32>
      %16 = arith.addf %11, %15 : vector<4x32xf32>
      %c2 = arith.constant 2 : index
      %c0_16 = arith.constant 0 : index
      %17 = tpu.strided_load %arg6[%c2, %c0_16] {strides = array<i32: 4, 1>} : memref<64x4xf32, #tpu.memory_space<vmem>>, vector<4x4xf32>
      %c2_17 = arith.constant 2 : index
      %c0_18 = arith.constant 0 : index
      %c0_19 = arith.constant 0 : index
      %18 = vector.load %arg3[%c2_17, %c0_18, %c0_19] : memref<16x4x32xf32, #tpu.memory_space<vmem>>, vector<1x4x32xf32>
      %19 = vector.shape_cast %18 : vector<1x4x32xf32> to vector<4x32xf32>
      %cst_20 = arith.constant dense<0.000000e+00> : vector<4x32xf32>
      %20 = tpu.matmul %17, %19, %cst_20 {dimension_numbers = #tpu.dot_dimension_numbers<[1], [0], [0], [1], [0, 0, 1, 1], [], []>} : vector<4x4xf32>, vector<4x32xf32>, vector<4x32xf32> -> vector<4x32xf32>
      %21 = arith.addf %16, %20 : vector<4x32xf32>
      %c3 = arith.constant 3 : index
      %c0_21 = arith.constant 0 : index
      %22 = tpu.strided_load %arg6[%c3, %c0_21] {strides = array<i32: 4, 1>} : memref<64x4xf32, #tpu.memory_space<vmem>>, vector<4x4xf32>
      %c3_22 = arith.constant 3 : index
      %c0_23 = arith.constant 0 : index
      %c0_24 = arith.constant 0 : index
      %23 = vector.load %arg3[%c3_22, %c0_23, %c0_24] : memref<16x4x32xf32, #tpu.memory_space<vmem>>, vector<1x4x32xf32>
      %24 = vector.shape_cast %23 : vector<1x4x32xf32> to vector<4x32xf32>
      %cst_25 = arith.constant dense<0.000000e+00> : vector<4x32xf32>
      %25 = tpu.matmul %22, %24, %cst_25 {dimension_numbers = #tpu.dot_dimension_numbers<[1], [0], [0], [1], [0, 0, 1, 1], [], []>} : vector<4x4xf32>, vector<4x32xf32>, vector<4x32xf32> -> vector<4x32xf32>
      %26 = arith.addf %21, %25 : vector<4x32xf32>
      %c16 = arith.constant 16 : index
      %c0_26 = arith.constant 0 : index
      %27 = tpu.strided_load %arg6[%c16, %c0_26] {strides = array<i32: 4, 1>} : memref<64x4xf32, #tpu.memory_space<vmem>>, vector<4x4xf32>
      %c4 = arith.constant 4 : index
      %c0_27 = arith.constant 0 : index
      %c0_28 = arith.constant 0 : index
      %28 = vector.load %arg3[%c4, %c0_27, %c0_28] : memref<16x4x32xf32, #tpu.memory_space<vmem>>, vector<1x4x32xf32>
      %29 = vector.shape_cast %28 : vector<1x4x32xf32> to vector<4x32xf32>
      %cst_29 = arith.constant dense<0.000000e+00> : vector<4x32xf32>
      %30 = tpu.matmul %27, %29, %cst_29 {dimension_numbers = #tpu.dot_dimension_numbers<[1], [0], [0], [1], [0, 0, 1, 1], [], []>} : vector<4x4xf32>, vector<4x32xf32>, vector<4x32xf32> -> vector<4x32xf32>
      %31 = arith.addf %26, %30 : vector<4x32xf32>
      %c17 = arith.constant 17 : index
      %c0_30 = arith.constant 0 : index
      %32 = tpu.strided_load %arg6[%c17, %c0_30] {strides = array<i32: 4, 1>} : memref<64x4xf32, #tpu.memory_space<vmem>>, vector<4x4xf32>
      %c5 = arith.constant 5 : index
      %c0_31 = arith.constant 0 : index
      %c0_32 = arith.constant 0 : index
      %33 = vector.load %arg3[%c5, %c0_31, %c0_32] : memref<16x4x32xf32, #tpu.memory_space<vmem>>, vector<1x4x32xf32>
      %34 = vector.shape_cast %33 : vector<1x4x32xf32> to vector<4x32xf32>
      %cst_33 = arith.constant dense<0.000000e+00> : vector<4x32xf32>
      %35 = tpu.matmul %32, %34, %cst_33 {dimension_numbers = #tpu.dot_dimension_numbers<[1], [0], [0], [1], [0, 0, 1, 1], [], []>} : vector<4x4xf32>, vector<4x32xf32>, vector<4x32xf32> -> vector<4x32xf32>
      %36 = arith.addf %31, %35 : vector<4x32xf32>
      %c18 = arith.constant 18 : index
      %c0_34 = arith.constant 0 : index
      %37 = tpu.strided_load %arg6[%c18, %c0_34] {strides = array<i32: 4, 1>} : memref<64x4xf32, #tpu.memory_space<vmem>>, vector<4x4xf32>
      %c6 = arith.constant 6 : index
      %c0_35 = arith.constant 0 : index
      %c0_36 = arith.constant 0 : index
      %38 = vector.load %arg3[%c6, %c0_35, %c0_36] : memref<16x4x32xf32, #tpu.memory_space<vmem>>, vector<1x4x32xf32>
      %39 = vector.shape_cast %38 : vector<1x4x32xf32> to vector<4x32xf32>
      %cst_37 = arith.constant dense<0.000000e+00> : vector<4x32xf32>
      %40 = tpu.matmul %37, %39, %cst_37 {dimension_numbers = #tpu.dot_dimension_numbers<[1], [0], [0], [1], [0, 0, 1, 1], [], []>} : vector<4x4xf32>, vector<4x32xf32>, vector<4x32xf32> -> vector<4x32xf32>
      %41 = arith.addf %36, %40 : vector<4x32xf32>
      %c19 = arith.constant 19 : index
      %c0_38 = arith.constant 0 : index
      %42 = tpu.strided_load %arg6[%c19, %c0_38] {strides = array<i32: 4, 1>} : memref<64x4xf32, #tpu.memory_space<vmem>>, vector<4x4xf32>
      %c7 = arith.constant 7 : index
      %c0_39 = arith.constant 0 : index
      %c0_40 = arith.constant 0 : index
      %43 = vector.load %arg3[%c7, %c0_39, %c0_40] : memref<16x4x32xf32, #tpu.memory_space<vmem>>, vector<1x4x32xf32>
      %44 = vector.shape_cast %43 : vector<1x4x32xf32> to vector<4x32xf32>
      %cst_41 = arith.constant dense<0.000000e+00> : vector<4x32xf32>
      %45 = tpu.matmul %42, %44, %cst_41 {dimension_numbers = #tpu.dot_dimension_numbers<[1], [0], [0], [1], [0, 0, 1, 1], [], []>} : vector<4x4xf32>, vector<4x32xf32>, vector<4x32xf32> -> vector<4x32xf32>
      %46 = arith.addf %41, %45 : vector<4x32xf32>
      %c32 = arith.constant 32 : index
      %c0_42 = arith.constant 0 : index
      %47 = tpu.strided_load %arg6[%c32, %c0_42] {strides = array<i32: 4, 1>} : memref<64x4xf32, #tpu.memory_space<vmem>>, vector<4x4xf32>
      %c8 = arith.constant 8 : index
      %c0_43 = arith.constant 0 : index
      %c0_44 = arith.constant 0 : index
      %48 = vector.load %arg3[%c8, %c0_43, %c0_44] : memref<16x4x32xf32, #tpu.memory_space<vmem>>, vector<1x4x32xf32>
      %49 = vector.shape_cast %48 : vector<1x4x32xf32> to vector<4x32xf32>
      %cst_45 = arith.constant dense<0.000000e+00> : vector<4x32xf32>
      %50 = tpu.matmul %47, %49, %cst_45 {dimension_numbers = #tpu.dot_dimension_numbers<[1], [0], [0], [1], [0, 0, 1, 1], [], []>} : vector<4x4xf32>, vector<4x32xf32>, vector<4x32xf32> -> vector<4x32xf32>
      %51 = arith.addf %46, %50 : vector<4x32xf32>
      %c33 = arith.constant 33 : index
      %c0_46 = arith.constant 0 : index
      %52 = tpu.strided_load %arg6[%c33, %c0_46] {strides = array<i32: 4, 1>} : memref<64x4xf32, #tpu.memory_space<vmem>>, vector<4x4xf32>
      %c9 = arith.constant 9 : index
      %c0_47 = arith.constant 0 : index
      %c0_48 = arith.constant 0 : index
      %53 = vector.load %arg3[%c9, %c0_47, %c0_48] : memref<16x4x32xf32, #tpu.memory_space<vmem>>, vector<1x4x32xf32>
      %54 = vector.shape_cast %53 : vector<1x4x32xf32> to vector<4x32xf32>
      %cst_49 = arith.constant dense<0.000000e+00> : vector<4x32xf32>
      %55 = tpu.matmul %52, %54, %cst_49 {dimension_numbers = #tpu.dot_dimension_numbers<[1], [0], [0], [1], [0, 0, 1, 1], [], []>} : vector<4x4xf32>, vector<4x32xf32>, vector<4x32xf32> -> vector<4x32xf32>
      %56 = arith.addf %51, %55 : vector<4x32xf32>
      %c34 = arith.constant 34 : index
      %c0_50 = arith.constant 0 : index
      %57 = tpu.strided_load %arg6[%c34, %c0_50] {strides = array<i32: 4, 1>} : memref<64x4xf32, #tpu.memory_space<vmem>>, vector<4x4xf32>
      %c10 = arith.constant 10 : index
      %c0_51 = arith.constant 0 : index
      %c0_52 = arith.constant 0 : index
      %58 = vector.load %arg3[%c10, %c0_51, %c0_52] : memref<16x4x32xf32, #tpu.memory_space<vmem>>, vector<1x4x32xf32>
      %59 = vector.shape_cast %58 : vector<1x4x32xf32> to vector<4x32xf32>
      %cst_53 = arith.constant dense<0.000000e+00> : vector<4x32xf32>
      %60 = tpu.matmul %57, %59, %cst_53 {dimension_numbers = #tpu.dot_dimension_numbers<[1], [0], [0], [1], [0, 0, 1, 1], [], []>} : vector<4x4xf32>, vector<4x32xf32>, vector<4x32xf32> -> vector<4x32xf32>
      %61 = arith.addf %56, %60 : vector<4x32xf32>
      %c35 = arith.constant 35 : index
      %c0_54 = arith.constant 0 : index
      %62 = tpu.strided_load %arg6[%c35, %c0_54] {strides = array<i32: 4, 1>} : memref<64x4xf32, #tpu.memory_space<vmem>>, vector<4x4xf32>
      %c11 = arith.constant 11 : index
      %c0_55 = arith.constant 0 : index
      %c0_56 = arith.constant 0 : index
      %63 = vector.load %arg3[%c11, %c0_55, %c0_56] : memref<16x4x32xf32, #tpu.memory_space<vmem>>, vector<1x4x32xf32>
      %64 = vector.shape_cast %63 : vector<1x4x32xf32> to vector<4x32xf32>
      %cst_57 = arith.constant dense<0.000000e+00> : vector<4x32xf32>
      %65 = tpu.matmul %62, %64, %cst_57 {dimension_numbers = #tpu.dot_dimension_numbers<[1], [0], [0], [1], [0, 0, 1, 1], [], []>} : vector<4x4xf32>, vector<4x32xf32>, vector<4x32xf32> -> vector<4x32xf32>
      %66 = arith.addf %61, %65 : vector<4x32xf32>
      %c48 = arith.constant 48 : index
      %c0_58 = arith.constant 0 : index
      %67 = tpu.strided_load %arg6[%c48, %c0_58] {strides = array<i32: 4, 1>} : memref<64x4xf32, #tpu.memory_space<vmem>>, vector<4x4xf32>
      %c12 = arith.constant 12 : index
      %c0_59 = arith.constant 0 : index
      %c0_60 = arith.constant 0 : index
      %68 = vector.load %arg3[%c12, %c0_59, %c0_60] : memref<16x4x32xf32, #tpu.memory_space<vmem>>, vector<1x4x32xf32>
      %69 = vector.shape_cast %68 : vector<1x4x32xf32> to vector<4x32xf32>
      %cst_61 = arith.constant dense<0.000000e+00> : vector<4x32xf32>
      %70 = tpu.matmul %67, %69, %cst_61 {dimension_numbers = #tpu.dot_dimension_numbers<[1], [0], [0], [1], [0, 0, 1, 1], [], []>} : vector<4x4xf32>, vector<4x32xf32>, vector<4x32xf32> -> vector<4x32xf32>
      %71 = arith.addf %66, %70 : vector<4x32xf32>
      %c49 = arith.constant 49 : index
      %c0_62 = arith.constant 0 : index
      %72 = tpu.strided_load %arg6[%c49, %c0_62] {strides = array<i32: 4, 1>} : memref<64x4xf32, #tpu.memory_space<vmem>>, vector<4x4xf32>
      %c13 = arith.constant 13 : index
      %c0_63 = arith.constant 0 : index
      %c0_64 = arith.constant 0 : index
      %73 = vector.load %arg3[%c13, %c0_63, %c0_64] : memref<16x4x32xf32, #tpu.memory_space<vmem>>, vector<1x4x32xf32>
      %74 = vector.shape_cast %73 : vector<1x4x32xf32> to vector<4x32xf32>
      %cst_65 = arith.constant dense<0.000000e+00> : vector<4x32xf32>
      %75 = tpu.matmul %72, %74, %cst_65 {dimension_numbers = #tpu.dot_dimension_numbers<[1], [0], [0], [1], [0, 0, 1, 1], [], []>} : vector<4x4xf32>, vector<4x32xf32>, vector<4x32xf32> -> vector<4x32xf32>
      %76 = arith.addf %71, %75 : vector<4x32xf32>
      %c50 = arith.constant 50 : index
      %c0_66 = arith.constant 0 : index
      %77 = tpu.strided_load %arg6[%c50, %c0_66] {strides = array<i32: 4, 1>} : memref<64x4xf32, #tpu.memory_space<vmem>>, vector<4x4xf32>
      %c14 = arith.constant 14 : index
      %c0_67 = arith.constant 0 : index
      %c0_68 = arith.constant 0 : index
      %78 = vector.load %arg3[%c14, %c0_67, %c0_68] : memref<16x4x32xf32, #tpu.memory_space<vmem>>, vector<1x4x32xf32>
      %79 = vector.shape_cast %78 : vector<1x4x32xf32> to vector<4x32xf32>
      %cst_69 = arith.constant dense<0.000000e+00> : vector<4x32xf32>
      %80 = tpu.matmul %77, %79, %cst_69 {dimension_numbers = #tpu.dot_dimension_numbers<[1], [0], [0], [1], [0, 0, 1, 1], [], []>} : vector<4x4xf32>, vector<4x32xf32>, vector<4x32xf32> -> vector<4x32xf32>
      %81 = arith.addf %76, %80 : vector<4x32xf32>
      %c51 = arith.constant 51 : index
      %c0_70 = arith.constant 0 : index
      %82 = tpu.strided_load %arg6[%c51, %c0_70] {strides = array<i32: 4, 1>} : memref<64x4xf32, #tpu.memory_space<vmem>>, vector<4x4xf32>
      %c15 = arith.constant 15 : index
      %c0_71 = arith.constant 0 : index
      %c0_72 = arith.constant 0 : index
      %83 = vector.load %arg3[%c15, %c0_71, %c0_72] : memref<16x4x32xf32, #tpu.memory_space<vmem>>, vector<1x4x32xf32>
      %84 = vector.shape_cast %83 : vector<1x4x32xf32> to vector<4x32xf32>
      %cst_73 = arith.constant dense<0.000000e+00> : vector<4x32xf32>
      %85 = tpu.matmul %82, %84, %cst_73 {dimension_numbers = #tpu.dot_dimension_numbers<[1], [0], [0], [1], [0, 0, 1, 1], [], []>} : vector<4x4xf32>, vector<4x32xf32>, vector<4x32xf32> -> vector<4x32xf32>
      %86 = arith.addf %81, %85 : vector<4x32xf32>
      %c0_74 = arith.constant 0 : index
      %c0_75 = arith.constant 0 : index
      %87 = vector.load %arg4[%c0_74, %c0_75] : memref<1x32xf32, #tpu.memory_space<vmem>>, vector<1x32xf32>
      %88 = vector.broadcast %87 : vector<1x32xf32> to vector<4x32xf32>
      %89 = arith.addf %86, %88 : vector<4x32xf32>
      %c4_i32_76 = arith.constant 4 : i32
      %90 = arith.muli %arg7, %c4_i32_76 : i32
      %c0_77 = arith.constant 0 : index
      %91 = arith.index_cast %90 : i32 to index
      %c0_78 = arith.constant 0 : index
      %92 = vector.load %arg5[%c0_77, %91, %c0_78] : memref<1x16x32xf32, #tpu.memory_space<vmem>>, vector<1x4x32xf32>
      %93 = vector.shape_cast %92 : vector<1x4x32xf32> to vector<4x32xf32>
      %94 = vector.shape_cast %89 : vector<4x32xf32> to vector<1x4x32xf32>
      tpu.vector_store %arg5[%c0_77, %91, %c0_78], %94 {strides = array<i32>} : memref<1x16x32xf32, #tpu.memory_space<vmem>>, vector<1x4x32xf32>,
    }
    %c4_i32_0 = arith.constant 4 : i32
    return
  }
  func.func @transform_0(%arg0: i32, %arg1: i32) -> (i32, i32, i32, i32) {
    %c0_i32 = arith.constant 0 : i32
    %c0_i32_0 = arith.constant 0 : i32
    %c0_i32_1 = arith.constant 0 : i32
    return %arg0, %c0_i32, %arg1, %c0_i32_0 : i32, i32, i32, i32
  }
  func.func @transform_1(%arg0: i32, %arg1: i32) -> (i32, i32, i32) {
    %c0_i32 = arith.constant 0 : i32
    %c0_i32_0 = arith.constant 0 : i32
    %c0_i32_1 = arith.constant 0 : i32
    %c0_i32_2 = arith.constant 0 : i32
    return %c0_i32, %c0_i32_0, %c0_i32_1 : i32, i32, i32
  }
  func.func @transform_2(%arg0: i32, %arg1: i32) -> (i32, i32) {
    %c0_i32 = arith.constant 0 : i32
    %c0_i32_0 = arith.constant 0 : i32
    %c0_i32_1 = arith.constant 0 : i32
    return %c0_i32, %c0_i32_0 : i32, i32
  }
  func.func @transform_3(%arg0: i32, %arg1: i32) -> (i32, i32, i32) {
    %c0_i32 = arith.constant 0 : i32
    %c0_i32_0 = arith.constant 0 : i32
    return %arg0, %arg1, %c0_i32 : i32, i32, i32
  }
}

</mosaic_0001>

<llo_original>
// kernel: _lambda_.1
$region0: #{_lambda_.1}
  #allocation0 [shape = 'u32[]', space=smem, size = 0x4, offset = 0x4, fixed_abs, tag = 'smem constant byte address 0x4 - core index']
  #allocation1 [shape = 'u32[72,128]{1,0:T(1,128)}', space=vmem, size = 0x9000, scoped, tag = 'internal scratch']
  #allocation2 [shape = 'f32[64,4]{1,0:T(8,128)}', space=vmem, size = 0x8000, scoped, tag = 'scratch operand']
  %s0 = inlined_call_operand.vmem [shape: f32[2,4,4,64], index: 0, kind: input, shape index: {}]
  %s1 = inlined_call_operand.vmem [shape: f32[16,4,32], index: 1, kind: input, shape index: {}]
  %s2 = inlined_call_operand.vmem [shape: f32[1,32], index: 2, kind: input, shape index: {}]
  %s3 = inlined_call_operand.hbm [shape: f32[2,16,32], index: 3, kind: output, shape index: {}]
  %s4 = sld [smem:[#allocation0]]
  $region52: #{_lambda_.1} parent=0
    _
  %s6 = ssub.s32 1, %s4
  %s7 = scalar_select 0, %s6, %s4
  $region1: #{_lambda_.1} parent=0
    #allocation3 [shape = 'u8[16384]{0}', space=vmem, size = 0x4000, scoped, tag = 'output window, operand 0']
    #allocation4 [shape = 's32[2]{0}', space=sflag, size = 0x8, scoped, tag = 'scoped memory for _lambda_.1']
    %8 = vsyncpa [#allocation4], 0
    %s9 = scalar_lea.sflag [#allocation4], 1
    %10 = vsyncpa %s9, 0
    loop: start=0, step=1, limit=4
    $region2: #{_lambda_.1} parent=1 // loop_pre_header
      _
    $region3: #{_lambda_.1} parent=1 // loop_header
      %s12 = sphi 0, %s16
      %p13 = scmp.ge.s32.totalorder %s12, 4
      %s19 = sphi 0, %s31
      %s20 = sphi 0, %s27
      %s21 = sphi 0, %s19
      %s22 = sphi 0, %s20
      %s23 = sphi 0, %s21
      %s24 = sphi 0, %s22
      %s36 = sphi 0, %s38
      %s39 = sphi 0, %s36
      %s40 = sphi 0, %s39
      %s56 = sphi 0, %s40
      %s60 = sphi 0, %s60
      %s62 = sphi 0, %s60
      %s63 = sphi 0, %s62
      %s77 = sphi 0, %s63
      %s81 = sphi 0, %s81
      %s83 = sphi 0, %s81
      %s84 = sphi 0, %s83
      %s98 = sphi 0, %s84
      %s106 = sphi 0, %s108
      %s109 = sphi 0, %s106
      %s110 = sphi 0, %s109
      %s126 = sphi 0, %s110
    $region4: #{_lambda_.1} parent=1 // loop_header_branch
      %15 = sbr.rel (%p13) target = $region8
    $region5: #{_lambda_.1} parent=1 // loop_body
      %s17 = ssub.s32 %s12, 1
      %s18 = ssub.s32 %s12, 2
      %s25 = sadd.s32 1, %s20
      %p26 = scmp.ge.s32.totalorder %s25, 1
      %s27 = scalar_select %p26, 0, %s25
      %s28 = sadd.s32 1, %s19
      %s29 = scalar_select %p26, %s28, %s19
      %p30 = scmp.ge.s32.totalorder %s29, 2
      %s31 = scalar_select %p30, 0, %s29
      %s32 = ssub.s32 %s19, %s31
      %s33 = ssub.s32 %s20, %s27
      %s34 = sor.u32 %s32, %s33
      %p35 = scmp.eq.s32.totalorder %s34, 0
      %s37 = sadd.s32 %s36, 1
      %s38 = scalar_select %p35, %s36, %s37
      %p41 = pneg %p35
      %p42 = scmp.eq.s32.totalorder %s12, 1
      %p43 = por %p41, %p42
      %p44 = scmp.ne.s32.totalorder %s36, %s39
      %p45 = scmp.eq.s32.totalorder %s12, 0
      %p46 = por %p44, %p45
      %p47 = scmp.ne.s32.totalorder %s36, %s39
      %p48 = scmp.eq.s32.totalorder %s17, 1
      %p49 = por %p47, %p48
      %p50 = scmp.ne.s32.totalorder %s39, %s40
      %p51 = scmp.eq.s32.totalorder %s17, 0
      %p52 = por %p50, %p51
      %p53 = scmp.ne.s32.totalorder %s39, %s40
      %p54 = scmp.eq.s32.totalorder %s18, 1
      %p55 = por %p53, %p54
      %p57 = scmp.ne.s32.totalorder %s40, %s56
      %p58 = scmp.eq.s32.totalorder %s18, 0
      %p59 = por %p57, %p58
      %s61 = sadd.s32 %s60, 1
      %p64 = scmp.eq.s32.totalorder %s12, 1
      %p65 = scmp.ne.s32.totalorder %s60, %s62
      %p66 = scmp.eq.s32.totalorder %s12, 0
      %p67 = por %p65, %p66
      %p68 = scmp.ne.s32.totalorder %s60, %s62
      %p69 = scmp.eq.s32.totalorder %s17, 1
      %p70 = por %p68, %p69
      %p71 = scmp.ne.s32.totalorder %s62, %s63
      %p72 = scmp.eq.s32.totalorder %s17, 0
      %p73 = por %p71, %p72
      %p74 = scmp.ne.s32.totalorder %s62, %s63
      %p75 = scmp.eq.s32.totalorder %s18, 1
      %p76 = por %p74, %p75
      %p78 = scmp.ne.s32.totalorder %s63, %s77
      %p79 = scmp.eq.s32.totalorder %s18, 0
      %p80 = por %p78, %p79
      %s82 = sadd.s32 %s81, 1
      %p85 = scmp.eq.s32.totalorder %s12, 1
      %p86 = scmp.ne.s32.totalorder %s81, %s83
      %p87 = scmp.eq.s32.totalorder %s12, 0
      %p88 = por %p86, %p87
      %p89 = scmp.ne.s32.totalorder %s81, %s83
      %p90 = scmp.eq.s32.totalorder %s17, 1
      %p91 = por %p89, %p90
      %p92 = scmp.ne.s32.totalorder %s83, %s84
      %p93 = scmp.eq.s32.totalorder %s17, 0
      %p94 = por %p92, %p93
      %p95 = scmp.ne.s32.totalorder %s83, %s84
      %p96 = scmp.eq.s32.totalorder %s18, 1
      %p97 = por %p95, %p96
      %p99 = scmp.ne.s32.totalorder %s84, %s98
      %p100 = scmp.eq.s32.totalorder %s18, 0
      %p101 = por %p99, %p100
      %s102 = ssub.s32 %s19, %s31
      %s103 = ssub.s32 %s20, %s27
      %s104 = sor.u32 %s102, %s103
      %p105 = scmp.eq.s32.totalorder %s104, 0
      %s107 = sadd.s32 %s106, 1
      %s108 = scalar_select %p105, %s106, %s107
      %p111 = pneg %p105
      %p112 = scmp.eq.s32.totalorder %s12, 1
      %p113 = por %p111, %p112
      %p114 = scmp.ne.s32.totalorder %s106, %s109
      %p115 = scmp.eq.s32.totalorder %s12, 0
      %p116 = por %p114, %p115
      %p117 = scmp.ne.s32.totalorder %s106, %s109
      %p118 = scmp.eq.s32.totalorder %s17, 1
      %p119 = por %p117, %p118
      %p120 = scmp.ne.s32.totalorder %s109, %s110
      %p121 = scmp.eq.s32.totalorder %s17, 0
      %p122 = por %p120, %p121
      %p123 = scmp.ne.s32.totalorder %s109, %s110
      %p124 = scmp.eq.s32.totalorder %s18, 1
      %p125 = por %p123, %p124
      %p127 = scmp.ne.s32.totalorder %s110, %s126
      %p128 = scmp.eq.s32.totalorder %s18, 0
      %p129 = por %p127, %p128
      %p130 = scmp.le.s32.totalorder 1, %s12
      %p131 = scmp.lt.s32.totalorder %s12, 3
      %p132 = pnand %p130, %p131
      %p133 = pneg %p132
      // Predicated region
      $region9: #{_lambda_.1} parent=5 // pred_check
        _
      $region10: #{_lambda_.1} parent=5 // pred_check_branch
        %135 = sbr.rel (%p132) target = $region12
      $region11: #{_lambda_.1} parent=5 // pred_region
        %s136 = ssub.s32 %s12, 1
        // Predicated region
        $region13: #{_lambda_.1} parent=11 // pred_check
          %p137 = pneg %p73
        $region14: #{_lambda_.1} parent=11 // pred_check_branch
          %139 = sbr.rel (%p137) target = $region16
        $region15: #{_lambda_.1} parent=11 // pred_region
          _
        $region16: #{_lambda_.1} parent=11 // pred_fallthru
          _
        // Predicated region
        $region17: #{_lambda_.1} parent=11 // pred_check
          %p140 = pneg %p94
        $region18: #{_lambda_.1} parent=11 // pred_check_branch
          %142 = sbr.rel (%p140) target = $region20
        $region19: #{_lambda_.1} parent=11 // pred_region
          _
        $region20: #{_lambda_.1} parent=11 // pred_fallthru
          _
      $region12: #{_lambda_.1} parent=5 // pred_fallthru
        _
      %p143 = scmp.lt.s32.totalorder %s12, 2
      // Predicated region
      $region21: #{_lambda_.1} parent=5 // pred_check
        %p144 = pneg %p143
      $region22: #{_lambda_.1} parent=5 // pred_check_branch
        %146 = sbr.rel (%p144) target = $region24
      $region23: #{_lambda_.1} parent=5 // pred_region
        // Predicated region
        $region25: #{_lambda_.1} parent=23 // pred_check
          %p147 = pneg %p46
        $region26: #{_lambda_.1} parent=23 // pred_check_branch
          %149 = sbr.rel (%p147) target = $region28
        $region27: #{_lambda_.1} parent=23 // pred_region
          %p150 = scmp.lt.s32.totalorder %s19, 1
          %s151 = scalar_select %p150, %s19, 1
          %p152 = scmp.lt.s32.totalorder %s20, 0
          %s153 = scalar_select %p152, %s20, 0
          %s154 = smul.addr %s151, 4
          %s155 = sadd.s32 %s153, %s154
          %s156 = smul.addr %s155, 4
          %s157 = scalar_lea.vmem %s0, %s156
        $region28: #{_lambda_.1} parent=23 // pred_fallthru
          _
      $region24: #{_lambda_.1} parent=5 // pred_fallthru
        _
      %p158 = scmp.le.s32.totalorder 1, %s12
      %p159 = scmp.lt.s32.totalorder %s12, 3
      %p160 = pnand %p158, %p159
      %p161 = pneg %p160
      // Predicated region
      $region29: #{_lambda_.1} parent=5 // pred_check
        _
      $region30: #{_lambda_.1} parent=5 // pred_check_branch
        %163 = sbr.rel (%p160) target = $region32
      $region31: #{_lambda_.1} parent=5 // pred_region
        %s164 = ssub.s32 %s12, 1
        %p165 = scmp.lt.s32.totalorder %s21, 1
        %s166 = scalar_select %p165, %s21, 1
        %p167 = scmp.lt.s32.totalorder %s22, 0
        %s168 = scalar_select %p167, %s22, 0
        %s169 = smul.addr %s166, 4
        %s170 = sadd.s32 %s168, %s169
        %s171 = smul.addr %s170, 4
        %s172 = scalar_lea.vmem %s0, %s171
        %p173 = pneg %p52
        %p174 = pneg %p49
        %p175 = pneg %p73
        %p176 = pneg %p70
        %p177 = pneg %p94
        %p178 = pneg %p91
        %p179 = pneg %p122
        %p180 = pneg %p119
        %s181 = sand.u32 %s109, 1
        %s182 = scalar_lea.sflag [#allocation4], %s181
        %s183 = sand.u32 %s109, 1
        %s184 = smul.addr %s183, 16
        %s185 = scalar_lea.vmem [#allocation3], %s184
        %p186 = scmp.lt.s32.totalorder %s21, 1
        %s187 = scalar_select %p186, %s21, 1
        %p188 = scmp.lt.s32.totalorder %s22, 0
        %s189 = scalar_select %p188, %s22, 0
        %s190 = smul.addr %s187, 4
        %s191 = sadd.s32 %s189, %s190
        %s192 = smul.addr %s191, 4
        %s193 = scalar_lea.vmem %s0, %s192
        %s194 = smul.u32 2, %s22
        loop: start=0, step=1, limit=4
        $region33: #{_lambda_.1} parent=31 // loop_pre_header
          _
        $region34: #{_lambda_.1} parent=31 // loop_header
          %s196 = sphi 0, %s200
          %p197 = scmp.ge.s32.totalorder %s196, 4
        $region35: #{_lambda_.1} parent=31 // loop_header_branch
          %199 = sbr.rel (%p197) target = $region39
        $region36: #{_lambda_.1} parent=31 // loop_body
          %s201 = scalar_lea.vmem %s193, %s196
          %v202 = vld [vmem:[%s201] sm:$0x1]
          %v203 = vld [vmem:[%s201 + $0x4] sm:$0x1]
          %v204 = vld [vmem:[%s201 + $0x8] sm:$0x1]
          %v205 = vld [vmem:[%s201 + $0xc] sm:$0x1]
          %v210 = vrot.slane %v203, 7
          %vm211 = vcmask 1041409
          %v212 = vsel %vm211, %v210, %v202
          %v213 = vrot.slane %v204, 6
          %vm214 = vcmask 1042434
          %v215 = vsel %vm214, %v213, %v212
          %v216 = vrot.slane %v205, 5
          %vm217 = vcmask 1043459
          %v218 = vsel %vm217, %v216, %v215
          %220 = vxpose.xlu0.b32.start [1/16] %v218, 128
          %221 = vxpose.xlu0.b32.cont [2/16] 0.0, 128
          %222 = vxpose.xlu0.b32.cont [3/16] 0.0, 128
          %223 = vxpose.xlu0.b32.cont [4/16] 0.0, 128
          %224 = vxpose.xlu0.b32.cont [5/16] 0.0, 128
          %225 = vxpose.xlu0.b32.cont [6/16] 0.0, 128
          %226 = vxpose.xlu0.b32.cont [7/16] 0.0, 128
          %227 = vxpose.xlu0.b32.cont [8/16] 0.0, 128
          %228 = vxpose.xlu0.b32.cont [9/16] 0.0, 128
          %229 = vxpose.xlu0.b32.cont [10/16] 0.0, 128
          %230 = vxpose.xlu0.b32.cont [11/16] 0.0, 128
          %231 = vxpose.xlu0.b32.cont [12/16] 0.0, 128
          %232 = vxpose.xlu0.b32.cont [13/16] 0.0, 128
          %233 = vxpose.xlu0.b32.cont [14/16] 0.0, 128
          %234 = vxpose.xlu0.b32.cont [15/16] 0.0, 128
          %235 = vxpose.xlu0.b32.end [16/16] 0.0, 128
          %v236 = vpop.trf.xlu0
          %v237 = vpop.trf.xlu0
          %v238 = vpop.trf.xlu0
          %v239 = vpop.trf.xlu0
          %v240 = vpop.trf.xlu0
          %v241 = vpop.trf.xlu0
          %v242 = vpop.trf.xlu0
          %v243 = vpop.trf.xlu0
          %v244 = vpop.trf.xlu0
          %v245 = vpop.trf.xlu0
          %v246 = vpop.trf.xlu0
          %v247 = vpop.trf.xlu0
          %v248 = vpop.trf.xlu0
          %v249 = vpop.trf.xlu0
          %v250 = vpop.trf.xlu0
          %v251 = vpop.trf.xlu0
          %vm252 = vcmask 31744
          %253 = vst.msk [vmem:[#allocation2] sm:$0xff] %vm252, %v236
          %254 = vst.msk [vmem:[#allocation2 + $0x8] sm:$0xff] %vm252, %v237
          %255 = vst.msk [vmem:[#allocation2 + $0x10] sm:$0xff] %vm252, %v238
          %256 = vst.msk [vmem:[#allocation2 + $0x18] sm:$0xff] %vm252, %v239
          %257 = vst.msk [vmem:[#allocation2 + $0x20] sm:$0xff] %vm252, %v240
          %258 = vst.msk [vmem:[#allocation2 + $0x28] sm:$0xff] %vm252, %v241
          %259 = vst.msk [vmem:[#allocation2 + $0x30] sm:$0xff] %vm252, %v242
          %260 = vst.msk [vmem:[#allocation2 + $0x38] sm:$0xff] %vm252, %v243
          %v261 = vld [vmem:[#allocation2] ss:$4 sm:$0xf]
          %v262 = vld [vmem:[%s1] sm:$0xf]
          %s263 = scalar_lea.vmem [#allocation2], 1
          %v264 = vld [vmem:[%s263] ss:$4 sm:$0xf]
          %s265 = scalar_lea.vmem %s1, 4
          %v266 = vld [vmem:[%s265] sm:$0xf]
          %v268 = vsel %vm252, %v264, 0
          %vm270 = vcmask 1043456
          %v272 = vsel %vm270, %v266, 0
          %274 = vmatpush.msra.mxu0 0.0
          %275 = vmatpush.msra.mxu0 0.0
          %276 = vmatpush.msra.mxu0 0.0
          %277 = vmatpush.msra.mxu0 0.0
          %278 = vmatpush.msra.mxu0 0.0
          %279 = vmatpush.msra.mxu0 0.0
          %280 = vmatpush.msra.mxu0 0.0
          %281 = vmatpush.msra.mxu0 0.0
          %282 = vmatpush.msra.mxu0 0.0
          %283 = vmatpush.msra.mxu0 0.0
          %284 = vmatpush.msra.mxu0 0.0
          %285 = vmatpush.msra.mxu0 0.0
          %286 = vmatpush.msra.mxu0 0.0
          %287 = vmatpush.msra.mxu0 0.0
          %288 = vmatpush.msra.mxu0 0.0
          %289 = vmatpush.msra.mxu0 %v272
          %290 = vmatmul.f32.gmra.mxu0 %v268
          %v291 = vpop.f32.mrf.mxu0
          %v292 = vadd.f32 0.0, %v291
          %293 = vdwg.mxu0
          %v295 = vsel %vm252, %v261, 0
          %v298 = vsel %vm270, %v262, 0
          %300 = vmatpush.msra.mxu0 0.0
          %301 = vmatpush.msra.mxu0 0.0
          %302 = vmatpush.msra.mxu0 0.0
          %303 = vmatpush.msra.mxu0 0.0
          %304 = vmatpush.msra.mxu0 0.0
          %305 = vmatpush.msra.mxu0 0.0
          %306 = vmatpush.msra.mxu0 0.0
          %307 = vmatpush.msra.mxu0 0.0
          %308 = vmatpush.msra.mxu0 0.0
          %309 = vmatpush.msra.mxu0 0.0
          %310 = vmatpush.msra.mxu0 0.0
          %311 = vmatpush.msra.mxu0 0.0
          %312 = vmatpush.msra.mxu0 0.0
          %313 = vmatpush.msra.mxu0 0.0
          %314 = vmatpush.msra.mxu0 0.0
          %315 = vmatpush.msra.mxu0 %v298
          %316 = vmatmul.f32.gmra.mxu0 %v295
          %v317 = vpop.f32.mrf.mxu0
          %v318 = vadd.f32 %v292, %v317
          %319 = vdwg.mxu0
          %s320 = scalar_lea.vmem [#allocation2], 2
          %v321 = vld [vmem:[%s320] ss:$4 sm:$0xf]
          %s322 = scalar_lea.vmem %s1, 8
          %v323 = vld [vmem:[%s322] sm:$0xf]
          %v325 = vsel %vm252, %v321, 0
          %v328 = vsel %vm270, %v323, 0
          %330 = vmatpush.msra.mxu0 0.0
          %331 = vmatpush.msra.mxu0 0.0
          %332 = vmatpush.msra.mxu0 0.0
          %333 = vmatpush.msra.mxu0 0.0
          %334 = vmatpush.msra.mxu0 0.0
          %335 = vmatpush.msra.mxu0 0.0
          %336 = vmatpush.msra.mxu0 0.0
          %337 = vmatpush.msra.mxu0 0.0
          %338 = vmatpush.msra.mxu0 0.0
          %339 = vmatpush.msra.mxu0 0.0
          %340 = vmatpush.msra.mxu0 0.0
          %341 = vmatpush.msra.mxu0 0.0
          %342 = vmatpush.msra.mxu0 0.0
          %343 = vmatpush.msra.mxu0 0.0
          %344 = vmatpush.msra.mxu0 0.0
          %345 = vmatpush.msra.mxu0 %v328
          %346 = vmatmul.f32.gmra.mxu0 %v325
          %v347 = vpop.f32.mrf.mxu0
          %v348 = vadd.f32 0.0, %v347
          %349 = vdwg.mxu0
          %v350 = vadd.f32 %v318, %v348
          %s351 = scalar_lea.vmem [#allocation2], 3
          %v352 = vld [vmem:[%s351] ss:$4 sm:$0xf]
          %s353 = scalar_lea.vmem %s1, 12
          %v354 = vld [vmem:[%s353] sm:$0xf]
          %v356 = vsel %vm252, %v352, 0
          %v359 = vsel %vm270, %v354, 0
          %361 = vmatpush.msra.mxu0 0.0
          %362 = vmatpush.msra.mxu0 0.0
          %363 = vmatpush.msra.mxu0 0.0
          %364 = vmatpush.msra.mxu0 0.0
          %365 = vmatpush.msra.mxu0 0.0
          %366 = vmatpush.msra.mxu0 0.0
          %367 = vmatpush.msra.mxu0 0.0
          %368 = vmatpush.msra.mxu0 0.0
          %369 = vmatpush.msra.mxu0 0.0
          %370 = vmatpush.msra.mxu0 0.0
          %371 = vmatpush.msra.mxu0 0.0
          %372 = vmatpush.msra.mxu0 0.0
          %373 = vmatpush.msra.mxu0 0.0
          %374 = vmatpush.msra.mxu0 0.0
          %375 = vmatpush.msra.mxu0 0.0
          %376 = vmatpush.msra.mxu0 %v359
          %377 = vmatmul.f32.gmra.mxu0 %v356
          %v378 = vpop.f32.mrf.mxu0
          %v379 = vadd.f32 0.0, %v378
          %380 = vdwg.mxu0
          %v381 = vadd.f32 %v350, %v379
          %s382 = scalar_lea.vmem [#allocation2], 16
          %v383 = vld [vmem:[%s382] ss:$4 sm:$0xf]
          %s384 = scalar_lea.vmem %s1, 16
          %v385 = vld [vmem:[%s384] sm:$0xf]
          %v387 = vsel %vm252, %v383, 0
          %v390 = vsel %vm270, %v385, 0
          %392 = vmatpush.msra.mxu0 0.0
          %393 = vmatpush.msra.mxu0 0.0
          %394 = vmatpush.msra.mxu0 0.0
          %395 = vmatpush.msra.mxu0 0.0
          %396 = vmatpush.msra.mxu0 0.0
          %397 = vmatpush.msra.mxu0 0.0
          %398 = vmatpush.msra.mxu0 0.0
          %399 = vmatpush.msra.mxu0 0.0
          %400 = vmatpush.msra.mxu0 0.0
          %401 = vmatpush.msra.mxu0 0.0
          %402 = vmatpush.msra.mxu0 0.0
          %403 = vmatpush.msra.mxu0 0.0
          %404 = vmatpush.msra.mxu0 0.0
          %405 = vmatpush.msra.mxu0 0.0
          %406 = vmatpush.msra.mxu0 0.0
          %407 = vmatpush.msra.mxu0 %v390
          %408 = vmatmul.f32.gmra.mxu0 %v387
          %v409 = vpop.f32.mrf.mxu0
          %v410 = vadd.f32 0.0, %v409
          %411 = vdwg.mxu0
          %v412 = vadd.f32 %v381, %v410
          %s413 = scalar_lea.vmem [#allocation2], 17
          %v414 = vld [vmem:[%s413] ss:$4 sm:$0xf]
          %s415 = scalar_lea.vmem %s1, 20
          %v416 = vld [vmem:[%s415] sm:$0xf]
          %v418 = vsel %vm252, %v414, 0
          %v421 = vsel %vm270, %v416, 0
          %423 = vmatpush.msra.mxu0 0.0
          %424 = vmatpush.msra.mxu0 0.0
          %425 = vmatpush.msra.mxu0 0.0
          %426 = vmatpush.msra.mxu0 0.0
          %427 = vmatpush.msra.mxu0 0.0
          %428 = vmatpush.msra.mxu0 0.0
          %429 = vmatpush.msra.mxu0 0.0
          %430 = vmatpush.msra.mxu0 0.0
          %431 = vmatpush.msra.mxu0 0.0
          %432 = vmatpush.msra.mxu0 0.0
          %433 = vmatpush.msra.mxu0 0.0
          %434 = vmatpush.msra.mxu0 0.0
          %435 = vmatpush.msra.mxu0 0.0
          %436 = vmatpush.msra.mxu0 0.0
          %437 = vmatpush.msra.mxu0 0.0
          %438 = vmatpush.msra.mxu0 %v421
          %439 = vmatmul.f32.gmra.mxu0 %v418
          %v440 = vpop.f32.mrf.mxu0
          %v441 = vadd.f32 0.0, %v440
          %442 = vdwg.mxu0
          %v443 = vadd.f32 %v412, %v441
          %s444 = scalar_lea.vmem [#allocation2], 18
          %v445 = vld [vmem:[%s444] ss:$4 sm:$0xf]
          %s446 = scalar_lea.vmem %s1, 24
          %v447 = vld [vmem:[%s446] sm:$0xf]
          %v449 = vsel %vm252, %v445, 0
          %v452 = vsel %vm270, %v447, 0
          %454 = vmatpush.msra.mxu0 0.0
          %455 = vmatpush.msra.mxu0 0.0
          %456 = vmatpush.msra.mxu0 0.0
          %457 = vmatpush.msra.mxu0 0.0
          %458 = vmatpush.msra.mxu0 0.0
          %459 = vmatpush.msra.mxu0 0.0
          %460 = vmatpush.msra.mxu0 0.0
          %461 = vmatpush.msra.mxu0 0.0
          %462 = vmatpush.msra.mxu0 0.0
          %463 = vmatpush.msra.mxu0 0.0
          %464 = vmatpush.msra.mxu0 0.0
          %465 = vmatpush.msra.mxu0 0.0
          %466 = vmatpush.msra.mxu0 0.0
          %467 = vmatpush.msra.mxu0 0.0
          %468 = vmatpush.msra.mxu0 0.0
          %469 = vmatpush.msra.mxu0 %v452
          %470 = vmatmul.f32.gmra.mxu0 %v449
          %v471 = vpop.f32.mrf.mxu0
          %v472 = vadd.f32 0.0, %v471
          %473 = vdwg.mxu0
          %v474 = vadd.f32 %v443, %v472
          %s475 = scalar_lea.vmem [#allocation2], 19
          %v476 = vld [vmem:[%s475] ss:$4 sm:$0xf]
          %s477 = scalar_lea.vmem %s1, 28
          %v478 = vld [vmem:[%s477] sm:$0xf]
          %v480 = vsel %vm252, %v476, 0
          %v483 = vsel %vm270, %v478, 0
          %485 = vmatpush.msra.mxu0 0.0
          %486 = vmatpush.msra.mxu0 0.0
          %487 = vmatpush.msra.mxu0 0.0
          %488 = vmatpush.msra.mxu0 0.0
          %489 = vmatpush.msra.mxu0 0.0
          %490 = vmatpush.msra.mxu0 0.0
          %491 = vmatpush.msra.mxu0 0.0
          %492 = vmatpush.msra.mxu0 0.0
          %493 = vmatpush.msra.mxu0 0.0
          %494 = vmatpush.msra.mxu0 0.0
          %495 = vmatpush.msra.mxu0 0.0
          %496 = vmatpush.msra.mxu0 0.0
          %497 = vmatpush.msra.mxu0 0.0
          %498 = vmatpush.msra.mxu0 0.0
          %499 = vmatpush.msra.mxu0 0.0
          %500 = vmatpush.msra.mxu0 %v483
          %501 = vmatmul.f32.gmra.mxu0 %v480
          %v502 = vpop.f32.mrf.mxu0
          %v503 = vadd.f32 0.0, %v502
          %504 = vdwg.mxu0
          %v505 = vadd.f32 %v474, %v503
          %s506 = scalar_lea.vmem [#allocation2], 32
          %v507 = vld [vmem:[%s506] ss:$4 sm:$0xf]
          %s508 = scalar_lea.vmem %s1, 32
          %v509 = vld [vmem:[%s508] sm:$0xf]
          %v511 = vsel %vm252, %v507, 0
          %v514 = vsel %vm270, %v509, 0
          %516 = vmatpush.msra.mxu0 0.0
          %517 = vmatpush.msra.mxu0 0.0
          %518 = vmatpush.msra.mxu0 0.0
          %519 = vmatpush.msra.mxu0 0.0
          %520 = vmatpush.msra.mxu0 0.0
          %521 = vmatpush.msra.mxu0 0.0
          %522 = vmatpush.msra.mxu0 0.0
          %523 = vmatpush.msra.mxu0 0.0
          %524 = vmatpush.msra.mxu0 0.0
          %525 = vmatpush.msra.mxu0 0.0
          %526 = vmatpush.msra.mxu0 0.0
          %527 = vmatpush.msra.mxu0 0.0
          %528 = vmatpush.msra.mxu0 0.0
          %529 = vmatpush.msra.mxu0 0.0
          %530 = vmatpush.msra.mxu0 0.0
          %531 = vmatpush.msra.mxu0 %v514
          %532 = vmatmul.f32.gmra.mxu0 %v511
          %v533 = vpop.f32.mrf.mxu0
          %v534 = vadd.f32 0.0, %v533
          %535 = vdwg.mxu0
          %v536 = vadd.f32 %v505, %v534
          %s537 = scalar_lea.vmem [#allocation2], 33
          %v538 = vld [vmem:[%s537] ss:$4 sm:$0xf]
          %s539 = scalar_lea.vmem %s1, 36
          %v540 = vld [vmem:[%s539] sm:$0xf]
          %v542 = vsel %vm252, %v538, 0
          %v545 = vsel %vm270, %v540, 0
          %547 = vmatpush.msra.mxu0 0.0
          %548 = vmatpush.msra.mxu0 0.0
          %549 = vmatpush.msra.mxu0 0.0
          %550 = vmatpush.msra.mxu0 0.0
          %551 = vmatpush.msra.mxu0 0.0
          %552 = vmatpush.msra.mxu0 0.0
          %553 = vmatpush.msra.mxu0 0.0
          %554 = vmatpush.msra.mxu0 0.0
          %555 = vmatpush.msra.mxu0 0.0
          %556 = vmatpush.msra.mxu0 0.0
          %557 = vmatpush.msra.mxu0 0.0
          %558 = vmatpush.msra.mxu0 0.0
          %559 = vmatpush.msra.mxu0 0.0
          %560 = vmatpush.msra.mxu0 0.0
          %561 = vmatpush.msra.mxu0 0.0
          %562 = vmatpush.msra.mxu0 %v545
          %563 = vmatmul.f32.gmra.mxu0 %v542
          %v564 = vpop.f32.mrf.mxu0
          %v565 = vadd.f32 0.0, %v564
          %566 = vdwg.mxu0
          %v567 = vadd.f32 %v536, %v565
          %s568 = scalar_lea.vmem [#allocation2], 34
          %v569 = vld [vmem:[%s568] ss:$4 sm:$0xf]
          %s570 = scalar_lea.vmem %s1, 40
          %v571 = vld [vmem:[%s570] sm:$0xf]
          %v573 = vsel %vm252, %v569, 0
          %v576 = vsel %vm270, %v571, 0
          %578 = vmatpush.msra.mxu0 0.0
          %579 = vmatpush.msra.mxu0 0.0
          %580 = vmatpush.msra.mxu0 0.0
          %581 = vmatpush.msra.mxu0 0.0
          %582 = vmatpush.msra.mxu0 0.0
          %583 = vmatpush.msra.mxu0 0.0
          %584 = vmatpush.msra.mxu0 0.0
          %585 = vmatpush.msra.mxu0 0.0
          %586 = vmatpush.msra.mxu0 0.0
          %587 = vmatpush.msra.mxu0 0.0
          %588 = vmatpush.msra.mxu0 0.0
          %589 = vmatpush.msra.mxu0 0.0
          %590 = vmatpush.msra.mxu0 0.0
          %591 = vmatpush.msra.mxu0 0.0
          %592 = vmatpush.msra.mxu0 0.0
          %593 = vmatpush.msra.mxu0 %v576
          %594 = vmatmul.f32.gmra.mxu0 %v573
          %v595 = vpop.f32.mrf.mxu0
          %v596 = vadd.f32 0.0, %v595
          %597 = vdwg.mxu0
          %v598 = vadd.f32 %v567, %v596
          %s599 = scalar_lea.vmem [#allocation2], 35
          %v600 = vld [vmem:[%s599] ss:$4 sm:$0xf]
          %s601 = scalar_lea.vmem %s1, 44
          %v602 = vld [vmem:[%s601] sm:$0xf]
          %v604 = vsel %vm252, %v600, 0
          %v607 = vsel %vm270, %v602, 0
          %609 = vmatpush.msra.mxu0 0.0
          %610 = vmatpush.msra.mxu0 0.0
          %611 = vmatpush.msra.mxu0 0.0
          %612 = vmatpush.msra.mxu0 0.0
          %613 = vmatpush.msra.mxu0 0.0
          %614 = vmatpush.msra.mxu0 0.0
          %615 = vmatpush.msra.mxu0 0.0
          %616 = vmatpush.msra.mxu0 0.0
          %617 = vmatpush.msra.mxu0 0.0
          %618 = vmatpush.msra.mxu0 0.0
          %619 = vmatpush.msra.mxu0 0.0
          %620 = vmatpush.msra.mxu0 0.0
          %621 = vmatpush.msra.mxu0 0.0
          %622 = vmatpush.msra.mxu0 0.0
          %623 = vmatpush.msra.mxu0 0.0
          %624 = vmatpush.msra.mxu0 %v607
          %625 = vmatmul.f32.gmra.mxu0 %v604
          %v626 = vpop.f32.mrf.mxu0
          %v627 = vadd.f32 0.0, %v626
          %628 = vdwg.mxu0
          %v629 = vadd.f32 %v598, %v627
          %s630 = scalar_lea.vmem [#allocation2], 48
          %v631 = vld [vmem:[%s630] ss:$4 sm:$0xf]
          %s632 = scalar_lea.vmem %s1, 48
          %v633 = vld [vmem:[%s632] sm:$0xf]
          %v635 = vsel %vm252, %v631, 0
          %v638 = vsel %vm270, %v633, 0
          %640 = vmatpush.msra.mxu0 0.0
          %641 = vmatpush.msra.mxu0 0.0
          %642 = vmatpush.msra.mxu0 0.0
          %643 = vmatpush.msra.mxu0 0.0
          %644 = vmatpush.msra.mxu0 0.0
          %645 = vmatpush.msra.mxu0 0.0
          %646 = vmatpush.msra.mxu0 0.0
          %647 = vmatpush.msra.mxu0 0.0
          %648 = vmatpush.msra.mxu0 0.0
          %649 = vmatpush.msra.mxu0 0.0
          %650 = vmatpush.msra.mxu0 0.0
          %651 = vmatpush.msra.mxu0 0.0
          %652 = vmatpush.msra.mxu0 0.0
          %653 = vmatpush.msra.mxu0 0.0
          %654 = vmatpush.msra.mxu0 0.0
          %655 = vmatpush.msra.mxu0 %v638
          %656 = vmatmul.f32.gmra.mxu0 %v635
          %v657 = vpop.f32.mrf.mxu0
          %v658 = vadd.f32 0.0, %v657
          %659 = vdwg.mxu0
          %v660 = vadd.f32 %v629, %v658
          %s661 = scalar_lea.vmem [#allocation2], 49
          %v662 = vld [vmem:[%s661] ss:$4 sm:$0xf]
          %s663 = scalar_lea.vmem %s1, 52
          %v664 = vld [vmem:[%s663] sm:$0xf]
          %v666 = vsel %vm252, %v662, 0
          %v669 = vsel %vm270, %v664, 0
          %671 = vmatpush.msra.mxu0 0.0
          %672 = vmatpush.msra.mxu0 0.0
          %673 = vmatpush.msra.mxu0 0.0
          %674 = vmatpush.msra.mxu0 0.0
          %675 = vmatpush.msra.mxu0 0.0
          %676 = vmatpush.msra.mxu0 0.0
          %677 = vmatpush.msra.mxu0 0.0
          %678 = vmatpush.msra.mxu0 0.0
          %679 = vmatpush.msra.mxu0 0.0
          %680 = vmatpush.msra.mxu0 0.0
          %681 = vmatpush.msra.mxu0 0.0
          %682 = vmatpush.msra.mxu0 0.0
          %683 = vmatpush.msra.mxu0 0.0
          %684 = vmatpush.msra.mxu0 0.0
          %685 = vmatpush.msra.mxu0 0.0
          %686 = vmatpush.msra.mxu0 %v669
          %687 = vmatmul.f32.gmra.mxu0 %v666
          %v688 = vpop.f32.mrf.mxu0
          %v689 = vadd.f32 0.0, %v688
          %690 = vdwg.mxu0
          %v691 = vadd.f32 %v660, %v689
          %s692 = scalar_lea.vmem [#allocation2], 50
          %v693 = vld [vmem:[%s692] ss:$4 sm:$0xf]
          %s694 = scalar_lea.vmem %s1, 56
          %v695 = vld [vmem:[%s694] sm:$0xf]
          %v697 = vsel %vm252, %v693, 0
          %v700 = vsel %vm270, %v695, 0
          %702 = vmatpush.msra.mxu0 0.0
          %703 = vmatpush.msra.mxu0 0.0
          %704 = vmatpush.msra.mxu0 0.0
          %705 = vmatpush.msra.mxu0 0.0
          %706 = vmatpush.msra.mxu0 0.0
          %707 = vmatpush.msra.mxu0 0.0
          %708 = vmatpush.msra.mxu0 0.0
          %709 = vmatpush.msra.mxu0 0.0
          %710 = vmatpush.msra.mxu0 0.0
          %711 = vmatpush.msra.mxu0 0.0
          %712 = vmatpush.msra.mxu0 0.0
          %713 = vmatpush.msra.mxu0 0.0
          %714 = vmatpush.msra.mxu0 0.0
          %715 = vmatpush.msra.mxu0 0.0
          %716 = vmatpush.msra.mxu0 0.0
          %717 = vmatpush.msra.mxu0 %v700
          %718 = vmatmul.f32.gmra.mxu0 %v697
          %v719 = vpop.f32.mrf.mxu0
          %v720 = vadd.f32 0.0, %v719
          %721 = vdwg.mxu0
          %v722 = vadd.f32 %v691, %v720
          %s723 = scalar_lea.vmem [#allocation2], 51
          %v724 = vld [vmem:[%s723] ss:$4 sm:$0xf]
          %s725 = scalar_lea.vmem %s1, 60
          %v726 = vld [vmem:[%s725] sm:$0xf]
          %v728 = vsel %vm252, %v724, 0
          %v731 = vsel %vm270, %v726, 0
          %733 = vmatpush.msra.mxu0 0.0
          %734 = vmatpush.msra.mxu0 0.0
          %735 = vmatpush.msra.mxu0 0.0
          %736 = vmatpush.msra.mxu0 0.0
          %737 = vmatpush.msra.mxu0 0.0
          %738 = vmatpush.msra.mxu0 0.0
          %739 = vmatpush.msra.mxu0 0.0
          %740 = vmatpush.msra.mxu0 0.0
          %741 = vmatpush.msra.mxu0 0.0
          %742 = vmatpush.msra.mxu0 0.0
          %743 = vmatpush.msra.mxu0 0.0
          %744 = vmatpush.msra.mxu0 0.0
          %745 = vmatpush.msra.mxu0 0.0
          %746 = vmatpush.msra.mxu0 0.0
          %747 = vmatpush.msra.mxu0 0.0
          %748 = vmatpush.msra.mxu0 %v731
          %749 = vmatmul.f32.gmra.mxu0 %v728
          %v750 = vpop.f32.mrf.mxu0
          %v751 = vadd.f32 0.0, %v750
          %752 = vdwg.mxu0
          %v753 = vadd.f32 %v722, %v751
          %v754 = vld [vmem:[%s2] sm:$0x1]
          %v756 = vperm.slane %v754, 0
          %v758 = vadd.f32 %v753, %v756
          %s759 = smul.u32 %s196, 4
          %s760 = scalar_lea.vmem %s185, %s759 [#allocation3]
          %vm761 = vcmask 257024
          %762 = vst.msk [vmem:[%s760] sm:$0xf] %vm761, %v758
        $region37: #{_lambda_.1} parent=31 // loop_footer
          %s200 = sadd.s32 1, %s196
        $region38: #{_lambda_.1} parent=31 // loop_footer_branch
          %195 = sbr.rel target = $region34
        $region39: #{_lambda_.1} parent=31 // loop_exit
          _
        %s763 = sand.u32 %s109, 1
        %s764 = scalar_lea.sflag [#allocation4], %s763
        %s765 = sand.u32 %s109, 1
        %s766 = smul.addr %s765, 16
        %s767 = scalar_lea.vmem [#allocation3], %s766
        // Predicated region
        $region40: #{_lambda_.1} parent=31 // pred_check
          %p768 = pneg %p119
        $region41: #{_lambda_.1} parent=31 // pred_check_branch
          %770 = sbr.rel (%p768) target = $region43
        $region42: #{_lambda_.1} parent=31 // pred_region
          %s771 = smul.u32 2, %s22
          %773 = vsyncadd %s764, 0
          %s774 = smul.addr %s21, 2
          %s775 = sadd.s32 %s771, %s774
          %s776 = smul.addr %s775, 8
          %s777 = scalar_lea.hbm %s3, %s776
          %s778 = sshll.u32 %s767, 4
          %s779 = int_to_ptr.vmem [resolvable:$true] %s778
          %s780 = sshll.u32 %s777, 4
          %s781 = int_to_ptr.hbm [resolvable:$true] %s780
          %786 = dma.vmem_to_hbm [thread:$0]  %s779, 256, %s781, %s764, 128, 128, 8
        $region43: #{_lambda_.1} parent=31 // pred_fallthru
          _
      $region32: #{_lambda_.1} parent=5 // pred_fallthru
        _
      %p787 = scmp.le.s32.totalorder 2, %s12
      // Predicated region
      $region44: #{_lambda_.1} parent=5 // pred_check
        %p788 = pneg %p787
      $region45: #{_lambda_.1} parent=5 // pred_check_branch
        %790 = sbr.rel (%p788) target = $region47
      $region46: #{_lambda_.1} parent=5 // pred_region
        %s791 = ssub.s32 %s12, 2
        // Predicated region
        $region48: #{_lambda_.1} parent=46 // pred_check
          %p792 = pneg %p125
        $region49: #{_lambda_.1} parent=46 // pred_check_branch
          %794 = sbr.rel (%p792) target = $region51
        $region50: #{_lambda_.1} parent=46 // pred_region
          %s795 = sand.u32 %s110, 1
          %s796 = scalar_lea.sflag [#allocation4], %s795
          %s797 = sand.u32 %s110, 1
          %s798 = smul.addr %s797, 16
          %s799 = scalar_lea.vmem [#allocation3], %s798
          %801 = dma.done %s796, 256
        $region51: #{_lambda_.1} parent=46 // pred_fallthru
          _
      $region47: #{_lambda_.1} parent=5 // pred_fallthru
        _
    $region6: #{_lambda_.1} parent=1 // loop_footer
      %s16 = sadd.s32 1, %s12
    $region7: #{_lambda_.1} parent=1 // loop_footer_branch
      %11 = sbr.rel target = $region3
    $region8: #{_lambda_.1} parent=1 // loop_exit
      _
    %802 = vsyncpa [#allocation4], 1
    %s803 = scalar_lea.sflag [#allocation4], 1
    %804 = vsyncpa %s803, 1

</llo_original>
